<compile_context>
chip_gen: v5e
topology: v5e:2x2
jax: 0.10.0
libtpu: 0.0.40
codegen_flags: <defaults>
</compile_context>

<pallas_src>
import math

import jax
import jax.numpy as jnp
from jax.experimental import pallas as pl
from jax.experimental.pallas import tpu as pltpu

LANE = 128
SUBLANE = 8


def _round_up(x: int, m: int) -> int:
    return ((x + m - 1) // m) * m


# ---------------------------------------------------------------------------
# Fused kernel: grid axis = layer index (0 = input linear, 1..L = GCN2Conv layers)
# ---------------------------------------------------------------------------
def make_fused_gcnii_kernel(alpha: float):
    alpha = float(alpha)

    def kernel(x_in_ref, adj_ref, w_ref, b_ref, o_ref, x_sc, x0_sc):
        l = pl.program_id(0)
        w = w_ref[0]  # [Fp, Fp] — layer-l weight slice (beta already folded in)

        @pl.when(l == 0)
        def _prologue():
            # x0 = relu(x_in @ W_lin^T + b)
            y = jnp.dot(x_in_ref[...], w, preferred_element_type=jnp.float32)
            y = jnp.maximum(y + b_ref[...], 0.0)
            x_sc[...] = y
            x0_sc[...] = y

        @pl.when(l > 0)
        def _conv_layer():
            # propagate: h = adj @ x   (adj stored bf16; values 0/1 are exact)
            adj = adj_ref[...].astype(jnp.float32)
            h = jnp.dot(adj, x_sc[...], preferred_element_type=jnp.float32)
            # initial residual mix
            z = (1.0 - alpha) * h + alpha * x0_sc[...]
            # identity mapping, beta folded into w:  (1-b)*z + b*(z@W) == z @ ((1-b)I + bW)
            out = jnp.dot(z, w, preferred_element_type=jnp.float32)
            x_sc[...] = jnp.maximum(out, 0.0)

        # Output block index is constant across the layer axis, so the HBM
        # writeback happens once at the end of the grid.
        o_ref[...] = x_sc[...]

    return kernel


# ---------------------------------------------------------------------------
# Wrapper: pad to lane-dense shapes, stack/fold weights, one pallas_call.
# ---------------------------------------------------------------------------
def gcnii_forward(x, adj, lin_w, lin_b, conv_ws, alpha, theta):
    n, f_in = x.shape
    f_out = lin_w.shape[0]
    num_layers = len(conv_ws)

    n_p = _round_up(max(n, SUBLANE), SUBLANE)
    f_p = _round_up(max(f_in, f_out, LANE), LANE)

    # --- zero-pad inputs (exact for this model) ---
    x_p = jnp.zeros((n_p, f_p), jnp.float32).at[:n, :f_in].set(x.astype(jnp.float32))
    adj_p = jnp.zeros((n_p, n_p), jnp.bfloat16).at[:n, :n].set(adj.astype(jnp.bfloat16))
    b_p = jnp.zeros((1, f_p), jnp.float32).at[0, :f_out].set(lin_b.astype(jnp.float32))

    # --- stack per-layer weights; fold beta_l into the conv weights ---
    # slot 0: W_lin^T (for x @ W_lin^T), slots 1..L: (1-beta_l)*I + beta_l*W_l
    w_stack = jnp.zeros((num_layers + 1, f_p, f_p), jnp.float32)
    w_stack = w_stack.at[0, :f_in, :f_out].set(lin_w.T.astype(jnp.float32))
    eye = jnp.eye(f_out, dtype=jnp.float32)
    for i, w in enumerate(conv_ws):
        beta = math.log(theta / (i + 1) + 1.0)
        w_fold = (1.0 - beta) * eye + beta * w.astype(jnp.float32)
        w_stack = w_stack.at[i + 1, :f_out, :f_out].set(w_fold)

    grid = (num_layers + 1,)
    kernel = make_fused_gcnii_kernel(alpha)

    out_p = pl.pallas_call(
        kernel,
        out_shape=jax.ShapeDtypeStruct((n_p, f_p), jnp.float32),
        grid=grid,
        in_specs=[
            pl.BlockSpec((n_p, f_p), lambda l: (0, 0)),        # x_in   (resident)
            pl.BlockSpec((n_p, n_p), lambda l: (0, 0)),        # adj    (resident, bf16)
            pl.BlockSpec((1, f_p, f_p), lambda l: (l, 0, 0)),  # weight (one slice / layer)
            pl.BlockSpec((1, f_p), lambda l: (0, 0)),          # bias   (resident)
        ],
        out_specs=pl.BlockSpec((n_p, f_p), lambda l: (0, 0)),  # resident accumulator
        scratch_shapes=[
            pltpu.VMEM((n_p, f_p), jnp.float32),  # running x (carried across layers)
            pltpu.VMEM((n_p, f_p), jnp.float32),  # x0
        ],
        compiler_params=pltpu.CompilerParams(
            dimension_semantics=("arbitrary",),   # layer axis carries state -> sequential
        ),
    )(x_p, adj_p, w_stack, b_p)

    return out_p[:n, :f_out]


# ---------------------------------------------------------------------------
# Pure-JAX reference (matches the PyTorch module semantics)
# ---------------------------------------------------------------------------
def gcnii_reference(x, adj, lin_w, lin_b, conv_ws, alpha, theta):
    x = x0 = jnp.maximum(x @ lin_w.T + lin_b, 0.0)
    for layer_idx, w in enumerate(conv_ws):
        beta = math.log(theta / (layer_idx + 1) + 1.0)
        h = adj @ x
        z = (1.0 - alpha) * h + alpha * x0
        out = (1.0 - beta) * z + beta * (z @ w)
        x = jnp.maximum(out, 0.0)
    return x


# ---------------------------------------------------------------------------
if __name__ == "__main__":
    N = 64            # number of nodes
    F_IN = 16         # embedding_dim_in
    F_OUT = 32        # embedding_dim_out
    NUM_LAYERS = 3
    ALPHA = 0.1
    THETA = 0.5

    key = jax.random.PRNGKey(0)
    k_x, k_adj, k_lw, k_lb, k_cw = jax.random.split(key, 5)

    x = jax.random.normal(k_x, (N, F_IN), dtype=jnp.float32)

    # dense adjacency (adj_t); normalize=False in GCN2Conv so it is used as-is
    adj = (jax.random.uniform(k_adj, (N, N)) < 0.1).astype(jnp.float32)

    # nn.Linear(embedding_dim_in, embedding_dim_out): weight [Fout, Fin], bias [Fout]
    lin_w = jax.random.normal(k_lw, (F_OUT, F_IN), dtype=jnp.float32) / math.sqrt(F_IN)
    lin_b = jax.random.normal(k_lb, (F_OUT,), dtype=jnp.float32) * 0.01

    # GCN2Conv.weight1 per layer: [Fout, Fout] (glorot-like scale)
    conv_keys = jax.random.split(k_cw, NUM_LAYERS)
    conv_ws = [
        jax.random.normal(kk, (F_OUT, F_OUT), dtype=jnp.float32) * math.sqrt(2.0 / (2 * F_OUT))
        for kk in conv_keys
    ]

    out = gcnii_forward(x, adj, lin_w, lin_b, conv_ws, ALPHA, THETA)
    out = jax.block_until_ready(out)

    ref = gcnii_reference(x, adj, lin_w, lin_b, conv_ws, ALPHA, THETA)
    assert out.shape == (N, F_OUT)
    assert jnp.allclose(out, ref, atol=5e-4, rtol=5e-4), "Pallas output mismatch vs JAX reference"

    print("KERNEL_OK")
</pallas_src>

<mosaic_0001>
module attributes {stable_mosaic.version = 11 : i64} {
  func.func @kernel(%arg0: i32, %arg1: memref<64x128xf32, #tpu.memory_space<vmem>>, %arg2: memref<64x64xbf16, #tpu.memory_space<vmem>>, %arg3: memref<1x128x128xf32, #tpu.memory_space<vmem>>, %arg4: memref<1x128xf32, #tpu.memory_space<vmem>>, %arg5: memref<64x128xf32, #tpu.memory_space<vmem>>, %arg6: memref<64x128xf32, #tpu.memory_space<vmem>>, %arg7: memref<64x128xf32, #tpu.memory_space<vmem>>) attributes {dimension_semantics = [#tpu.dimension_semantics<arbitrary>], iteration_bounds = array<i64: 4>, scalar_prefetch = 0 : i64, scratch_operands = 2 : i64, tpu.core_type = #tpu.core_type<tc>, window_params = [{pipeline_mode = #tpu.pipeline_mode<synchronous>, transform_indices = @transform_0, window_bounds = array<i64: 64, 128>}, {pipeline_mode = #tpu.pipeline_mode<synchronous>, transform_indices = @transform_1, window_bounds = array<i64: 64, 64>}, {transform_indices = @transform_2, window_bounds = array<i64: 1, 128, 128>}, {pipeline_mode = #tpu.pipeline_mode<synchronous>, transform_indices = @transform_3, window_bounds = array<i64: 1, 128>}, {pipeline_mode = #tpu.pipeline_mode<synchronous>, transform_indices = @transform_4, window_bounds = array<i64: 64, 128>}]} {
    %c0 = arith.constant 0 : index
    %c0_0 = arith.constant 0 : index
    %c0_1 = arith.constant 0 : index
    %0 = vector.load %arg3[%c0, %c0_0, %c0_1] : memref<1x128x128xf32, #tpu.memory_space<vmem>>, vector<1x128x128xf32>
    %1 = vector.shape_cast %0 : vector<1x128x128xf32> to vector<128x128xf32>
    %c0_i32 = arith.constant 0 : i32
    %2 = arith.cmpi eq, %arg0, %c0_i32 : i32
    %3 = arith.extui %2 : i1 to i32
    %c0_i32_2 = arith.constant 0 : i32
    %4 = arith.cmpi ne, %3, %c0_i32_2 : i32
    scf.if %4 {
      %c0_9 = arith.constant 0 : index
      %c0_10 = arith.constant 0 : index
      %10 = vector.load %arg1[%c0_9, %c0_10] : memref<64x128xf32, #tpu.memory_space<vmem>>, vector<64x128xf32>
      %cst = arith.constant dense<0.000000e+00> : vector<64x128xf32>
      %11 = tpu.matmul %10, %1, %cst {dimension_numbers = #tpu.dot_dimension_numbers<[1], [0], [0], [1], [0, 0, 1, 1], [], []>} : vector<64x128xf32>, vector<128x128xf32>, vector<64x128xf32> -> vector<64x128xf32>
      %c0_11 = arith.constant 0 : index
      %c0_12 = arith.constant 0 : index
      %12 = vector.load %arg4[%c0_11, %c0_12] : memref<1x128xf32, #tpu.memory_space<vmem>>, vector<1x128xf32>
      %13 = vector.broadcast %12 : vector<1x128xf32> to vector<64x128xf32>
      %14 = arith.addf %11, %13 : vector<64x128xf32>
      %cst_13 = arith.constant 0.000000e+00 : f32
      %15 = vector.broadcast %cst_13 : f32 to vector<64x128xf32>
      %16 = arith.maximumf %14, %15 : vector<64x128xf32>
      %c0_14 = arith.constant 0 : index
      %c0_15 = arith.constant 0 : index
      %17 = vector.load %arg6[%c0_14, %c0_15] : memref<64x128xf32, #tpu.memory_space<vmem>>, vector<64x128xf32>
      tpu.vector_store %arg6[%c0_14, %c0_15], %16 {strides = array<i32>} : memref<64x128xf32, #tpu.memory_space<vmem>>, vector<64x128xf32>,
      %c0_16 = arith.constant 0 : index
      %c0_17 = arith.constant 0 : index
      %18 = vector.load %arg7[%c0_16, %c0_17] : memref<64x128xf32, #tpu.memory_space<vmem>>, vector<64x128xf32>
      tpu.vector_store %arg7[%c0_16, %c0_17], %16 {strides = array<i32>} : memref<64x128xf32, #tpu.memory_space<vmem>>, vector<64x128xf32>,
    } else {
    }
    %c0_i32_3 = arith.constant 0 : i32
    %5 = arith.cmpi sgt, %arg0, %c0_i32_3 : i32
    %6 = arith.extui %5 : i1 to i32
    %c0_i32_4 = arith.constant 0 : i32
    %7 = arith.cmpi ne, %6, %c0_i32_4 : i32
    scf.if %7 {
      %c0_9 = arith.constant 0 : index
      %c0_10 = arith.constant 0 : index
      %10 = vector.load %arg2[%c0_9, %c0_10] : memref<64x64xbf16, #tpu.memory_space<vmem>>, vector<64x64xbf16>
      %11 = arith.extf %10 : vector<64x64xbf16> to vector<64x64xf32>
      %c0_11 = arith.constant 0 : index
      %c0_12 = arith.constant 0 : index
      %12 = vector.load %arg6[%c0_11, %c0_12] : memref<64x128xf32, #tpu.memory_space<vmem>>, vector<64x128xf32>
      %cst = arith.constant dense<0.000000e+00> : vector<64x128xf32>
      %13 = tpu.matmul %11, %12, %cst {dimension_numbers = #tpu.dot_dimension_numbers<[1], [0], [0], [1], [0, 0, 1, 1], [], []>} : vector<64x64xf32>, vector<64x128xf32>, vector<64x128xf32> -> vector<64x128xf32>
      %cst_13 = arith.constant 0.899999976 : f32
      %14 = vector.broadcast %cst_13 : f32 to vector<64x128xf32>
      %15 = arith.mulf %14, %13 : vector<64x128xf32>
      %c0_14 = arith.constant 0 : index
      %c0_15 = arith.constant 0 : index
      %16 = vector.load %arg7[%c0_14, %c0_15] : memref<64x128xf32, #tpu.memory_space<vmem>>, vector<64x128xf32>
      %cst_16 = arith.constant 1.000000e-01 : f32
      %17 = vector.broadcast %cst_16 : f32 to vector<64x128xf32>
      %18 = arith.mulf %17, %16 : vector<64x128xf32>
      %19 = arith.addf %15, %18 : vector<64x128xf32>
      %cst_17 = arith.constant dense<0.000000e+00> : vector<64x128xf32>
      %20 = tpu.matmul %19, %1, %cst_17 {dimension_numbers = #tpu.dot_dimension_numbers<[1], [0], [0], [1], [0, 0, 1, 1], [], []>} : vector<64x128xf32>, vector<128x128xf32>, vector<64x128xf32> -> vector<64x128xf32>
      %cst_18 = arith.constant 0.000000e+00 : f32
      %21 = vector.broadcast %cst_18 : f32 to vector<64x128xf32>
      %22 = arith.maximumf %20, %21 : vector<64x128xf32>
      %c0_19 = arith.constant 0 : index
      %c0_20 = arith.constant 0 : index
      %23 = vector.load %arg6[%c0_19, %c0_20] : memref<64x128xf32, #tpu.memory_space<vmem>>, vector<64x128xf32>
      tpu.vector_store %arg6[%c0_19, %c0_20], %22 {strides = array<i32>} : memref<64x128xf32, #tpu.memory_space<vmem>>, vector<64x128xf32>,
    } else {
    }
    %c0_5 = arith.constant 0 : index
    %c0_6 = arith.constant 0 : index
    %8 = vector.load %arg6[%c0_5, %c0_6] : memref<64x128xf32, #tpu.memory_space<vmem>>, vector<64x128xf32>
    %c0_7 = arith.constant 0 : index
    %c0_8 = arith.constant 0 : index
    %9 = vector.load %arg5[%c0_7, %c0_8] : memref<64x128xf32, #tpu.memory_space<vmem>>, vector<64x128xf32>
    tpu.vector_store %arg5[%c0_7, %c0_8], %8 {strides = array<i32>} : memref<64x128xf32, #tpu.memory_space<vmem>>, vector<64x128xf32>,
    return
  }
  func.func @transform_0(%arg0: i32) -> (i32, i32) {
    %c0_i32 = arith.constant 0 : i32
    %c0_i32_0 = arith.constant 0 : i32
    %c0_i32_1 = arith.constant 0 : i32
    return %c0_i32, %c0_i32_0 : i32, i32
  }
  func.func @transform_1(%arg0: i32) -> (i32, i32) {
    %c0_i32 = arith.constant 0 : i32
    %c0_i32_0 = arith.constant 0 : i32
    %c0_i32_1 = arith.constant 0 : i32
    return %c0_i32, %c0_i32_0 : i32, i32
  }
  func.func @transform_2(%arg0: i32) -> (i32, i32, i32) {
    %c0_i32 = arith.constant 0 : i32
    %c0_i32_0 = arith.constant 0 : i32
    %c0_i32_1 = arith.constant 0 : i32
    return %arg0, %c0_i32, %c0_i32_0 : i32, i32, i32
  }
  func.func @transform_3(%arg0: i32) -> (i32, i32) {
    %c0_i32 = arith.constant 0 : i32
    %c0_i32_0 = arith.constant 0 : i32
    %c0_i32_1 = arith.constant 0 : i32
    return %c0_i32, %c0_i32_0 : i32, i32
  }
  func.func @transform_4(%arg0: i32) -> (i32, i32) {
    %c0_i32 = arith.constant 0 : i32
    %c0_i32_0 = arith.constant 0 : i32
    %c0_i32_1 = arith.constant 0 : i32
    return %c0_i32, %c0_i32_0 : i32, i32
  }
}

</mosaic_0001>

<llo_original>
// kernel: tpu_custom_call.1
$region0: #{tpu_custom_call.1}
  #allocation0 [shape = 'u32[]', space=smem, size = 0x4, offset = 0x4, fixed_abs, tag = 'smem constant byte address 0x4 - core index']
  #allocation1 [shape = 'u32[72,128]{1,0:T(1,128)}', space=vmem, size = 0x9000, scoped, tag = 'internal scratch']
  #allocation2 [shape = 'f32[64,128]{1,0:T(8,128)}', space=vmem, size = 0x8000, scoped, tag = 'scratch operand']
  #allocation3 [shape = 'f32[64,128]{1,0:T(8,128)}', space=vmem, size = 0x8000, scoped, tag = 'scratch operand']
  %s0 = inlined_call_operand.hbm [shape: f32[64,128], index: 0, kind: input, shape index: {}]
  %s1 = inlined_call_operand.hbm [shape: bf16[64,64], index: 1, kind: input, shape index: {}]
  %s2 = inlined_call_operand.hbm [shape: f32[4,128,128], index: 2, kind: input, shape index: {}]
  %s3 = inlined_call_operand.vmem [shape: f32[1,128], index: 3, kind: input, shape index: {}]
  %s4 = inlined_call_operand.hbm [shape: f32[64,128], index: 4, kind: output, shape index: {}]
  %s5 = sld [smem:[#allocation0]]
  $region69: #{tpu_custom_call.1} parent=0
    _
  %s7 = ssub.s32 1, %s5
  %s8 = scalar_select 0, %s7, %s5
  $region1: #{tpu_custom_call.1} parent=0
    #allocation4 [shape = 'u8[32768]{0}', space=vmem, size = 0x8000, scoped, tag = 'input window, operand 0, single buffered']
    #allocation5 [shape = 's32[2]{0}', space=sflag, size = 0x8, scoped, tag = 'scoped memory for tpu_custom_call.1']
    #allocation6 [shape = 's32[2]{0}', space=sflag, size = 0x8, scoped, tag = 'scoped memory for tpu_custom_call.1']
    #allocation7 [shape = 'u8[16384]{0}', space=vmem, size = 0x4000, scoped, tag = 'input window, operand 1, single buffered']
    #allocation8 [shape = 's32[1]{0}', space=sflag, size = 0x4, scoped, tag = 'scoped memory for tpu_custom_call.1']
    #allocation9 [shape = 'u8[131072]{0}', space=vmem, size = 0x20000, scoped, tag = 'input window, operand 2']
    #allocation10 [shape = 'u8[32768]{0}', space=vmem, size = 0x8000, scoped, tag = 'output window, operand 0, single buffered']
    %9 = vsyncpa [#allocation5], 0
    %10 = vsyncpa [#allocation8], 0
    %11 = vsyncpa [#allocation6], 0
    loop: start=0, step=1, limit=6
    $region2: #{tpu_custom_call.1} parent=1 // loop_pre_header
      _
    $region3: #{tpu_custom_call.1} parent=1 // loop_header
      %s13 = sphi 0, %s17
      %p14 = scmp.ge.s32.totalorder %s13, 6
      %s21 = sphi 0, %s21
      %s23 = sphi 0, %s21
      %s24 = sphi 0, %s23
      %s38 = sphi 0, %s24
      %s42 = sphi 0, %s42
      %s44 = sphi 0, %s42
      %s45 = sphi 0, %s44
      %s59 = sphi 0, %s45
      %s65 = sphi 0, %s67
      %s68 = sphi 0, %s65
      %s69 = sphi 0, %s68
      %s85 = sphi 0, %s69
      %s89 = sphi 0, %s89
      %s91 = sphi 0, %s89
      %s92 = sphi 0, %s91
      %s106 = sphi 0, %s92
      %s110 = sphi 0, %s110
      %s112 = sphi 0, %s110
      %s113 = sphi 0, %s112
      %s127 = sphi 0, %s113
    $region4: #{tpu_custom_call.1} parent=1 // loop_header_branch
      %16 = sbr.rel (%p14) target = $region8
    $region5: #{tpu_custom_call.1} parent=1 // loop_body
      %s18 = ssub.s32 %s13, 1
      %s19 = ssub.s32 %s13, 2
      %s20 = sadd.s32 %s13, 1
      %s22 = sadd.s32 %s21, 1
      %p25 = scmp.eq.s32.totalorder %s13, 3
      %p26 = scmp.ne.s32.totalorder %s21, %s23
      %p27 = scmp.eq.s32.totalorder %s13, 0
      %p28 = por %p26, %p27
      %p29 = scmp.ne.s32.totalorder %s21, %s23
      %p30 = scmp.eq.s32.totalorder %s18, 3
      %p31 = por %p29, %p30
      %p32 = scmp.ne.s32.totalorder %s23, %s24
      %p33 = scmp.eq.s32.totalorder %s18, 0
      %p34 = por %p32, %p33
      %p35 = scmp.ne.s32.totalorder %s23, %s24
      %p36 = scmp.eq.s32.totalorder %s19, 3
      %p37 = por %p35, %p36
      %p39 = scmp.ne.s32.totalorder %s24, %s38
      %p40 = scmp.eq.s32.totalorder %s19, 0
      %p41 = por %p39, %p40
      %s43 = sadd.s32 %s42, 1
      %p46 = scmp.eq.s32.totalorder %s13, 3
      %p47 = scmp.ne.s32.totalorder %s42, %s44
      %p48 = scmp.eq.s32.totalorder %s13, 0
      %p49 = por %p47, %p48
      %p50 = scmp.ne.s32.totalorder %s42, %s44
      %p51 = scmp.eq.s32.totalorder %s18, 3
      %p52 = por %p50, %p51
      %p53 = scmp.ne.s32.totalorder %s44, %s45
      %p54 = scmp.eq.s32.totalorder %s18, 0
      %p55 = por %p53, %p54
      %p56 = scmp.ne.s32.totalorder %s44, %s45
      %p57 = scmp.eq.s32.totalorder %s19, 3
      %p58 = por %p56, %p57
      %p60 = scmp.ne.s32.totalorder %s45, %s59
      %p61 = scmp.eq.s32.totalorder %s19, 0
      %p62 = por %p60, %p61
      %s63 = ssub.s32 %s13, %s20
      %p64 = scmp.eq.s32.totalorder %s63, 0
      %s66 = sadd.s32 %s65, 1
      %s67 = scalar_select %p64, %s65, %s66
      %p70 = pneg %p64
      %p71 = scmp.eq.s32.totalorder %s13, 3
      %p72 = por %p70, %p71
      %p73 = scmp.ne.s32.totalorder %s65, %s68
      %p74 = scmp.eq.s32.totalorder %s13, 0
      %p75 = por %p73, %p74
      %p76 = scmp.ne.s32.totalorder %s65, %s68
      %p77 = scmp.eq.s32.totalorder %s18, 3
      %p78 = por %p76, %p77
      %p79 = scmp.ne.s32.totalorder %s68, %s69
      %p80 = scmp.eq.s32.totalorder %s18, 0
      %p81 = por %p79, %p80
      %p82 = scmp.ne.s32.totalorder %s68, %s69
      %p83 = scmp.eq.s32.totalorder %s19, 3
      %p84 = por %p82, %p83
      %p86 = scmp.ne.s32.totalorder %s69, %s85
      %p87 = scmp.eq.s32.totalorder %s19, 0
      %p88 = por %p86, %p87
      %s90 = sadd.s32 %s89, 1
      %p93 = scmp.eq.s32.totalorder %s13, 3
      %p94 = scmp.ne.s32.totalorder %s89, %s91
      %p95 = scmp.eq.s32.totalorder %s13, 0
      %p96 = por %p94, %p95
      %p97 = scmp.ne.s32.totalorder %s89, %s91
      %p98 = scmp.eq.s32.totalorder %s18, 3
      %p99 = por %p97, %p98
      %p100 = scmp.ne.s32.totalorder %s91, %s92
      %p101 = scmp.eq.s32.totalorder %s18, 0
      %p102 = por %p100, %p101
      %p103 = scmp.ne.s32.totalorder %s91, %s92
      %p104 = scmp.eq.s32.totalorder %s19, 3
      %p105 = por %p103, %p104
      %p107 = scmp.ne.s32.totalorder %s92, %s106
      %p108 = scmp.eq.s32.totalorder %s19, 0
      %p109 = por %p107, %p108
      %s111 = sadd.s32 %s110, 1
      %p114 = scmp.eq.s32.totalorder %s13, 3
      %p115 = scmp.ne.s32.totalorder %s110, %s112
      %p116 = scmp.eq.s32.totalorder %s13, 0
      %p117 = por %p115, %p116
      %p118 = scmp.ne.s32.totalorder %s110, %s112
      %p119 = scmp.eq.s32.totalorder %s18, 3
      %p120 = por %p118, %p119
      %p121 = scmp.ne.s32.totalorder %s112, %s113
      %p122 = scmp.eq.s32.totalorder %s18, 0
      %p123 = por %p121, %p122
      %p124 = scmp.ne.s32.totalorder %s112, %s113
      %p125 = scmp.eq.s32.totalorder %s19, 3
      %p126 = por %p124, %p125
      %p128 = scmp.ne.s32.totalorder %s113, %s127
      %p129 = scmp.eq.s32.totalorder %s19, 0
      %p130 = por %p128, %p129
      %p131 = scmp.le.s32.totalorder 1, %s13
      %p132 = scmp.lt.s32.totalorder %s13, 5
      %p133 = pnand %p131, %p132
      %p134 = pneg %p133
      // Predicated region
      $region9: #{tpu_custom_call.1} parent=5 // pred_check
        _
      $region10: #{tpu_custom_call.1} parent=5 // pred_check_branch
        %136 = sbr.rel (%p133) target = $region12
      $region11: #{tpu_custom_call.1} parent=5 // pred_region
        %s137 = ssub.s32 %s13, 1
        // Predicated region
        $region13: #{tpu_custom_call.1} parent=11 // pred_check
          %p138 = pneg %p34
        $region14: #{tpu_custom_call.1} parent=11 // pred_check_branch
          %140 = sbr.rel (%p138) target = $region16
        $region15: #{tpu_custom_call.1} parent=11 // pred_region
          %142 = vsyncadd [#allocation5], 0
          %s143 = sshll.u32 %s0, 4
          %s144 = int_to_ptr.hbm [resolvable:$true] %s143
          %s145 = sshll.u32 [#allocation4], 4
          %s146 = int_to_ptr.vmem [resolvable:$true] %s145
          %151 = dma.hbm_to_vmem [thread:$0]  %s144, 1024, %s146, [#allocation5], 128, 128, 8
        $region16: #{tpu_custom_call.1} parent=11 // pred_fallthru
          _
        // Predicated region
        $region17: #{tpu_custom_call.1} parent=11 // pred_check
          %p152 = pneg %p55
        $region18: #{tpu_custom_call.1} parent=11 // pred_check_branch
          %154 = sbr.rel (%p152) target = $region20
        $region19: #{tpu_custom_call.1} parent=11 // pred_region
          %156 = vsyncadd [#allocation8], 0
          %s157 = sshll.u32 %s1, 4
          %s158 = int_to_ptr.hbm [resolvable:$true] %s157
          %s159 = sshll.u32 [#allocation7], 4
          %s160 = int_to_ptr.vmem [resolvable:$true] %s159
          %165 = dma.hbm_to_vmem [thread:$0]  %s158, 512, %s160, [#allocation8], 64, 64, 4
        $region20: #{tpu_custom_call.1} parent=11 // pred_fallthru
          _
        // Predicated region
        $region21: #{tpu_custom_call.1} parent=11 // pred_check
          %p166 = pneg %p102
        $region22: #{tpu_custom_call.1} parent=11 // pred_check_branch
          %168 = sbr.rel (%p166) target = $region24
        $region23: #{tpu_custom_call.1} parent=11 // pred_region
          _
        $region24: #{tpu_custom_call.1} parent=11 // pred_fallthru
          _
      $region12: #{tpu_custom_call.1} parent=5 // pred_fallthru
        _
      %p169 = scmp.lt.s32.totalorder %s13, 4
      // Predicated region
      $region25: #{tpu_custom_call.1} parent=5 // pred_check
        %p170 = pneg %p169
      $region26: #{tpu_custom_call.1} parent=5 // pred_check_branch
        %172 = sbr.rel (%p170) target = $region28
      $region27: #{tpu_custom_call.1} parent=5 // pred_region
        // Predicated region
        $region29: #{tpu_custom_call.1} parent=27 // pred_check
          %p173 = pneg %p75
        $region30: #{tpu_custom_call.1} parent=27 // pred_check_branch
          %175 = sbr.rel (%p173) target = $region32
        $region31: #{tpu_custom_call.1} parent=27 // pred_region
          %s176 = sand.u32 %s13, 1
          %s177 = scalar_lea.sflag [#allocation5], %s176
          %s178 = sand.u32 %s65, 1
          %s179 = smul.addr %s178, 128
          %s180 = scalar_lea.vmem [#allocation9], %s179
          %182 = vsyncadd %s177, 0
          %s183 = smul.addr %s13, 16
          %s184 = smul.addr %s183, 8
          %s185 = scalar_lea.hbm %s2, %s184
          %s186 = sshll.u32 %s185, 4
          %s187 = int_to_ptr.hbm [resolvable:$true] %s186
          %s188 = sshll.u32 %s180, 4
          %s189 = int_to_ptr.vmem [resolvable:$true] %s188
          %194 = dma.hbm_to_vmem [thread:$0]  %s187, 2048, %s189, %s177, 128, 128, 8
        $region32: #{tpu_custom_call.1} parent=27 // pred_fallthru
          _
      $region28: #{tpu_custom_call.1} parent=5 // pred_fallthru
        _
      %p195 = scmp.le.s32.totalorder 1, %s13
      %p196 = scmp.lt.s32.totalorder %s13, 5
      %p197 = pnand %p195, %p196
      %p198 = pneg %p197
      // Predicated region
      $region33: #{tpu_custom_call.1} parent=5 // pred_check
        _
      $region34: #{tpu_custom_call.1} parent=5 // pred_check_branch
        %200 = sbr.rel (%p197) target = $region36
      $region35: #{tpu_custom_call.1} parent=5 // pred_region
        %s201 = ssub.s32 %s13, 1
        // Predicated region
        $region37: #{tpu_custom_call.1} parent=35 // pred_check
          %p202 = pneg %p34
        $region38: #{tpu_custom_call.1} parent=35 // pred_check_branch
          %204 = sbr.rel (%p202) target = $region40
        $region39: #{tpu_custom_call.1} parent=35 // pred_region
          %206 = dma.done [#allocation5], 1024
        $region40: #{tpu_custom_call.1} parent=35 // pred_fallthru
          _
        // Predicated region
        $region41: #{tpu_custom_call.1} parent=35 // pred_check
          %p207 = pneg %p55
        $region42: #{tpu_custom_call.1} parent=35 // pred_check_branch
          %209 = sbr.rel (%p207) target = $region44
        $region43: #{tpu_custom_call.1} parent=35 // pred_region
          %211 = dma.done [#allocation8], 512
        $region44: #{tpu_custom_call.1} parent=35 // pred_fallthru
          _
        %s212 = sand.u32 %s18, 1
        %s213 = scalar_lea.sflag [#allocation5], %s212
        %s214 = sand.u32 %s68, 1
        %s215 = smul.addr %s214, 128
        %s216 = scalar_lea.vmem [#allocation9], %s215
        // Predicated region
        $region45: #{tpu_custom_call.1} parent=35 // pred_check
          %p217 = pneg %p81
        $region46: #{tpu_custom_call.1} parent=35 // pred_check_branch
          %219 = sbr.rel (%p217) target = $region48
        $region47: #{tpu_custom_call.1} parent=35 // pred_region
          %221 = dma.done %s213, 2048
        $region48: #{tpu_custom_call.1} parent=35 // pred_fallthru
          _
        %p222 = pneg %p34
        %p223 = pneg %p31
        %p224 = pneg %p55
        %p225 = pneg %p52
        %s226 = sand.u32 %s18, 1
        %s227 = scalar_lea.sflag [#allocation5], %s226
        %s228 = sand.u32 %s68, 1
        %s229 = smul.addr %s228, 128
        %s230 = scalar_lea.vmem [#allocation9], %s229
        %p231 = pneg %p81
        %p232 = pneg %p78
        %p233 = pneg %p102
        %p234 = pneg %p99
        %p235 = pneg %p123
        %p236 = pneg %p120
        %v237 = vld [vmem:[%s216] sm:$0xff]
        %v238 = vld [vmem:[%s216 + $0x8] sm:$0xff]
        %v239 = vld [vmem:[%s216 + $0x10] sm:$0xff]
        %v240 = vld [vmem:[%s216 + $0x18] sm:$0xff]
        %v241 = vld [vmem:[%s216 + $0x20] sm:$0xff]
        %v242 = vld [vmem:[%s216 + $0x28] sm:$0xff]
        %v243 = vld [vmem:[%s216 + $0x30] sm:$0xff]
        %v244 = vld [vmem:[%s216 + $0x38] sm:$0xff]
        %v245 = vld [vmem:[%s216 + $0x40] sm:$0xff]
        %v246 = vld [vmem:[%s216 + $0x48] sm:$0xff]
        %v247 = vld [vmem:[%s216 + $0x50] sm:$0xff]
        %v248 = vld [vmem:[%s216 + $0x58] sm:$0xff]
        %v249 = vld [vmem:[%s216 + $0x60] sm:$0xff]
        %v250 = vld [vmem:[%s216 + $0x68] sm:$0xff]
        %v251 = vld [vmem:[%s216 + $0x70] sm:$0xff]
        %v252 = vld [vmem:[%s216 + $0x78] sm:$0xff]
        %p253 = scmp.eq.s32.totalorder %s18, 0
        // Predicated region
        $region49: #{tpu_custom_call.1} parent=35 // pred_check
          %p254 = pneg %p253
        $region50: #{tpu_custom_call.1} parent=35 // pred_check_branch
          %256 = sbr.rel (%p254) target = $region52
        $region51: #{tpu_custom_call.1} parent=35 // pred_region
          %v257 = vld [vmem:[#allocation4] sm:$0xff]
          %v258 = vld [vmem:[#allocation4 + $0x8] sm:$0xff]
          %v259 = vld [vmem:[#allocation4 + $0x10] sm:$0xff]
          %v260 = vld [vmem:[#allocation4 + $0x18] sm:$0xff]
          %v261 = vld [vmem:[#allocation4 + $0x20] sm:$0xff]
          %v262 = vld [vmem:[#allocation4 + $0x28] sm:$0xff]
          %v263 = vld [vmem:[#allocation4 + $0x30] sm:$0xff]
          %v264 = vld [vmem:[#allocation4 + $0x38] sm:$0xff]
          %v265 = vld [vmem:[%s3] sm:$0x1]
          %v267 = vperm.slane %v265, 0
          %269 = vmatpush.msra.mxu0 %v252
          %270 = vmatpush.msra.mxu0 %v251
          %271 = vmatpush.msra.mxu0 %v250
          %272 = vmatpush.msra.mxu0 %v249
          %273 = vmatpush.msra.mxu0 %v248
          %274 = vmatpush.msra.mxu0 %v247
          %275 = vmatpush.msra.mxu0 %v246
          %276 = vmatpush.msra.mxu0 %v245
          %277 = vmatpush.msra.mxu0 %v244
          %278 = vmatpush.msra.mxu0 %v243
          %279 = vmatpush.msra.mxu0 %v242
          %280 = vmatpush.msra.mxu0 %v241
          %281 = vmatpush.msra.mxu0 %v240
          %282 = vmatpush.msra.mxu0 %v239
          %283 = vmatpush.msra.mxu0 %v238
          %284 = vmatpush.msra.mxu0 %v237
          %285 = vmatmul.f32.gmra.mxu0 %v257
          %v286 = vpop.f32.mrf.mxu0
          %v287 = vadd.f32 %v267, %v286
          %288 = vmatmul.f32.gmra.mxu0 %v258
          %v289 = vpop.f32.mrf.mxu0
          %v290 = vadd.f32 %v267, %v289
          %291 = vmatmul.f32.gmra.mxu0 %v259
          %v292 = vpop.f32.mrf.mxu0
          %v293 = vadd.f32 %v267, %v292
          %294 = vmatmul.f32.gmra.mxu0 %v260
          %v295 = vpop.f32.mrf.mxu0
          %v296 = vadd.f32 %v267, %v295
          %297 = vmatmul.f32.gmra.mxu0 %v261
          %v298 = vpop.f32.mrf.mxu0
          %v299 = vadd.f32 %v267, %v298
          %300 = vmatmul.f32.gmra.mxu0 %v262
          %v301 = vpop.f32.mrf.mxu0
          %v302 = vadd.f32 %v267, %v301
          %303 = vmatmul.f32.gmra.mxu0 %v263
          %v304 = vpop.f32.mrf.mxu0
          %v305 = vadd.f32 %v267, %v304
          %306 = vmatmul.f32.gmra.mxu0 %v264
          %v307 = vpop.f32.mrf.mxu0
          %v308 = vadd.f32 %v267, %v307
          %309 = vdwg.mxu0
          %v310 = vmax.f32 %v287, 0.0
          %v311 = vmax.f32 %v290, 0.0
          %v312 = vmax.f32 %v293, 0.0
          %v313 = vmax.f32 %v296, 0.0
          %v314 = vmax.f32 %v299, 0.0
          %v315 = vmax.f32 %v302, 0.0
          %v316 = vmax.f32 %v305, 0.0
          %v317 = vmax.f32 %v308, 0.0
          %318 = vst [vmem:[#allocation2] sm:$0xff] %v310
          %319 = vst [vmem:[#allocation2 + $0x8] sm:$0xff] %v311
          %320 = vst [vmem:[#allocation2 + $0x10] sm:$0xff] %v312
          %321 = vst [vmem:[#allocation2 + $0x18] sm:$0xff] %v313
          %322 = vst [vmem:[#allocation2 + $0x20] sm:$0xff] %v314
          %323 = vst [vmem:[#allocation2 + $0x28] sm:$0xff] %v315
          %324 = vst [vmem:[#allocation2 + $0x30] sm:$0xff] %v316
          %325 = vst [vmem:[#allocation2 + $0x38] sm:$0xff] %v317
          %326 = vst [vmem:[#allocation3] sm:$0xff] %v310
          %327 = vst [vmem:[#allocation3 + $0x8] sm:$0xff] %v311
          %328 = vst [vmem:[#allocation3 + $0x10] sm:$0xff] %v312
          %329 = vst [vmem:[#allocation3 + $0x18] sm:$0xff] %v313
          %330 = vst [vmem:[#allocation3 + $0x20] sm:$0xff] %v314
          %331 = vst [vmem:[#allocation3 + $0x28] sm:$0xff] %v315
          %332 = vst [vmem:[#allocation3 + $0x30] sm:$0xff] %v316
          %333 = vst [vmem:[#allocation3 + $0x38] sm:$0xff] %v317
        $region52: #{tpu_custom_call.1} parent=35 // pred_fallthru
          _
        %p334 = scmp.gt.s32.totalorder %s18, 0
        // Predicated region
        $region53: #{tpu_custom_call.1} parent=35 // pred_check
          %p335 = pneg %p334
        $region54: #{tpu_custom_call.1} parent=35 // pred_check_branch
          %337 = sbr.rel (%p335) target = $region56
        $region55: #{tpu_custom_call.1} parent=35 // pred_region
          %v338 = vld [vmem:[#allocation7] sm:$0xf]
          %v339 = vld [vmem:[#allocation7 + $0x4] sm:$0xf]
          %v340 = vld [vmem:[#allocation7 + $0x8] sm:$0xf]
          %v341 = vld [vmem:[#allocation7 + $0xc] sm:$0xf]
          %v342 = vld [vmem:[#allocation7 + $0x10] sm:$0xf]
          %v343 = vld [vmem:[#allocation7 + $0x14] sm:$0xf]
          %v344 = vld [vmem:[#allocation7 + $0x18] sm:$0xf]
          %v345 = vld [vmem:[#allocation7 + $0x1c] sm:$0xf]
          %v346 = vunpack.c.l.bf16 %v338
          %v347 = vunpack.c.l.bf16 %v339
          %v348 = vunpack.c.l.bf16 %v340
          %v349 = vunpack.c.l.bf16 %v341
          %v350 = vunpack.c.l.bf16 %v342
          %v351 = vunpack.c.l.bf16 %v343
          %v352 = vunpack.c.l.bf16 %v344
          %v353 = vunpack.c.l.bf16 %v345
          %v354 = vld [vmem:[#allocation2] sm:$0xff]
          %v355 = vld [vmem:[#allocation2 + $0x8] sm:$0xff]
          %v356 = vld [vmem:[#allocation2 + $0x10] sm:$0xff]
          %v357 = vld [vmem:[#allocation2 + $0x18] sm:$0xff]
          %v358 = vld [vmem:[#allocation2 + $0x20] sm:$0xff]
          %v359 = vld [vmem:[#allocation2 + $0x28] sm:$0xff]
          %v360 = vld [vmem:[#allocation2 + $0x30] sm:$0xff]
          %v361 = vld [vmem:[#allocation2 + $0x38] sm:$0xff]
          %vm362 = vcmask 523264
          %v364 = vsel %vm362, %v346, 0
          %v367 = vsel %vm362, %v347, 0
          %v370 = vsel %vm362, %v348, 0
          %v373 = vsel %vm362, %v349, 0
          %v376 = vsel %vm362, %v350, 0
          %v379 = vsel %vm362, %v351, 0
          %v382 = vsel %vm362, %v352, 0
          %v385 = vsel %vm362, %v353, 0
          %387 = vmatpush.msra.mxu0 0.0
          %388 = vmatpush.msra.mxu0 0.0
          %389 = vmatpush.msra.mxu0 0.0
          %390 = vmatpush.msra.mxu0 0.0
          %391 = vmatpush.msra.mxu0 0.0
          %392 = vmatpush.msra.mxu0 0.0
          %393 = vmatpush.msra.mxu0 0.0
          %394 = vmatpush.msra.mxu0 0.0
          %395 = vmatpush.msra.mxu0 %v361
          %396 = vmatpush.msra.mxu0 %v360
          %397 = vmatpush.msra.mxu0 %v359
          %398 = vmatpush.msra.mxu0 %v358
          %399 = vmatpush.msra.mxu0 %v357
          %400 = vmatpush.msra.mxu0 %v356
          %401 = vmatpush.msra.mxu0 %v355
          %402 = vmatpush.msra.mxu0 %v354
          %403 = vmatmul.f32.gmra.mxu0 %v364
          %v404 = vpop.f32.mrf.mxu0
          %v405 = vadd.f32 0.0, %v404
          %406 = vmatmul.f32.gmra.mxu0 %v367
          %v407 = vpop.f32.mrf.mxu0
          %v408 = vadd.f32 0.0, %v407
          %409 = vmatmul.f32.gmra.mxu0 %v370
          %v410 = vpop.f32.mrf.mxu0
          %v411 = vadd.f32 0.0, %v410
          %412 = vmatmul.f32.gmra.mxu0 %v373
          %v413 = vpop.f32.mrf.mxu0
          %v414 = vadd.f32 0.0, %v413
          %415 = vmatmul.f32.gmra.mxu0 %v376
          %v416 = vpop.f32.mrf.mxu0
          %v417 = vadd.f32 0.0, %v416
          %418 = vmatmul.f32.gmra.mxu0 %v379
          %v419 = vpop.f32.mrf.mxu0
          %v420 = vadd.f32 0.0, %v419
          %421 = vmatmul.f32.gmra.mxu0 %v382
          %v422 = vpop.f32.mrf.mxu0
          %v423 = vadd.f32 0.0, %v422
          %424 = vmatmul.f32.gmra.mxu0 %v385
          %v425 = vpop.f32.mrf.mxu0
          %v426 = vadd.f32 0.0, %v425
          %427 = vdwg.mxu0
          %v428 = vmul.f32 %v405, 0.9
          %v429 = vmul.f32 %v408, 0.9
          %v430 = vmul.f32 %v411, 0.9
          %v431 = vmul.f32 %v414, 0.9
          %v432 = vmul.f32 %v417, 0.9
          %v433 = vmul.f32 %v420, 0.9
          %v434 = vmul.f32 %v423, 0.9
          %v435 = vmul.f32 %v426, 0.9
          %v436 = vld [vmem:[#allocation3] sm:$0xff]
          %v437 = vld [vmem:[#allocation3 + $0x8] sm:$0xff]
          %v438 = vld [vmem:[#allocation3 + $0x10] sm:$0xff]
          %v439 = vld [vmem:[#allocation3 + $0x18] sm:$0xff]
          %v440 = vld [vmem:[#allocation3 + $0x20] sm:$0xff]
          %v441 = vld [vmem:[#allocation3 + $0x28] sm:$0xff]
          %v442 = vld [vmem:[#allocation3 + $0x30] sm:$0xff]
          %v443 = vld [vmem:[#allocation3 + $0x38] sm:$0xff]
          %v444 = vmul.f32 %v436, 0.1
          %v445 = vmul.f32 %v437, 0.1
          %v446 = vmul.f32 %v438, 0.1
          %v447 = vmul.f32 %v439, 0.1
          %v448 = vmul.f32 %v440, 0.1
          %v449 = vmul.f32 %v441, 0.1
          %v450 = vmul.f32 %v442, 0.1
          %v451 = vmul.f32 %v443, 0.1
          %v452 = vadd.f32 %v428, %v444
          %v453 = vadd.f32 %v429, %v445
          %v454 = vadd.f32 %v430, %v446
          %v455 = vadd.f32 %v431, %v447
          %v456 = vadd.f32 %v432, %v448
          %v457 = vadd.f32 %v433, %v449
          %v458 = vadd.f32 %v434, %v450
          %v459 = vadd.f32 %v435, %v451
          %460 = vmatpush.msra.mxu0 %v252
          %461 = vmatpush.msra.mxu0 %v251
          %462 = vmatpush.msra.mxu0 %v250
          %463 = vmatpush.msra.mxu0 %v249
          %464 = vmatpush.msra.mxu0 %v248
          %465 = vmatpush.msra.mxu0 %v247
          %466 = vmatpush.msra.mxu0 %v246
          %467 = vmatpush.msra.mxu0 %v245
          %468 = vmatpush.msra.mxu0 %v244
          %469 = vmatpush.msra.mxu0 %v243
          %470 = vmatpush.msra.mxu0 %v242
          %471 = vmatpush.msra.mxu0 %v241
          %472 = vmatpush.msra.mxu0 %v240
          %473 = vmatpush.msra.mxu0 %v239
          %474 = vmatpush.msra.mxu0 %v238
          %475 = vmatpush.msra.mxu0 %v237
          %476 = vmatmul.f32.gmra.mxu0 %v452
          %v477 = vpop.f32.mrf.mxu0
          %v478 = vadd.f32 0.0, %v477
          %479 = vmatmul.f32.gmra.mxu0 %v453
          %v480 = vpop.f32.mrf.mxu0
          %v481 = vadd.f32 0.0, %v480
          %482 = vmatmul.f32.gmra.mxu0 %v454
          %v483 = vpop.f32.mrf.mxu0
          %v484 = vadd.f32 0.0, %v483
          %485 = vmatmul.f32.gmra.mxu0 %v455
          %v486 = vpop.f32.mrf.mxu0
          %v487 = vadd.f32 0.0, %v486
          %488 = vmatmul.f32.gmra.mxu0 %v456
          %v489 = vpop.f32.mrf.mxu0
          %v490 = vadd.f32 0.0, %v489
          %491 = vmatmul.f32.gmra.mxu0 %v457
          %v492 = vpop.f32.mrf.mxu0
          %v493 = vadd.f32 0.0, %v492
          %494 = vmatmul.f32.gmra.mxu0 %v458
          %v495 = vpop.f32.mrf.mxu0
          %v496 = vadd.f32 0.0, %v495
          %497 = vmatmul.f32.gmra.mxu0 %v459
          %v498 = vpop.f32.mrf.mxu0
          %v499 = vadd.f32 0.0, %v498
          %500 = vdwg.mxu0
          %v501 = vmax.f32 %v478, 0.0
          %v502 = vmax.f32 %v481, 0.0
          %v503 = vmax.f32 %v484, 0.0
          %v504 = vmax.f32 %v487, 0.0
          %v505 = vmax.f32 %v490, 0.0
          %v506 = vmax.f32 %v493, 0.0
          %v507 = vmax.f32 %v496, 0.0
          %v508 = vmax.f32 %v499, 0.0
          %509 = vst [vmem:[#allocation2] sm:$0xff] %v501
          %510 = vst [vmem:[#allocation2 + $0x8] sm:$0xff] %v502
          %511 = vst [vmem:[#allocation2 + $0x10] sm:$0xff] %v503
          %512 = vst [vmem:[#allocation2 + $0x18] sm:$0xff] %v504
          %513 = vst [vmem:[#allocation2 + $0x20] sm:$0xff] %v505
          %514 = vst [vmem:[#allocation2 + $0x28] sm:$0xff] %v506
          %515 = vst [vmem:[#allocation2 + $0x30] sm:$0xff] %v507
          %516 = vst [vmem:[#allocation2 + $0x38] sm:$0xff] %v508
        $region56: #{tpu_custom_call.1} parent=35 // pred_fallthru
          _
        %v517 = vld [vmem:[#allocation2] sm:$0xff]
        %v518 = vld [vmem:[#allocation2 + $0x8] sm:$0xff]
        %v519 = vld [vmem:[#allocation2 + $0x10] sm:$0xff]
        %v520 = vld [vmem:[#allocation2 + $0x18] sm:$0xff]
        %v521 = vld [vmem:[#allocation2 + $0x20] sm:$0xff]
        %v522 = vld [vmem:[#allocation2 + $0x28] sm:$0xff]
        %v523 = vld [vmem:[#allocation2 + $0x30] sm:$0xff]
        %v524 = vld [vmem:[#allocation2 + $0x38] sm:$0xff]
        %525 = vst [vmem:[#allocation10] sm:$0xff] %v517
        %526 = vst [vmem:[#allocation10 + $0x8] sm:$0xff] %v518
        %527 = vst [vmem:[#allocation10 + $0x10] sm:$0xff] %v519
        %528 = vst [vmem:[#allocation10 + $0x18] sm:$0xff] %v520
        %529 = vst [vmem:[#allocation10 + $0x20] sm:$0xff] %v521
        %530 = vst [vmem:[#allocation10 + $0x28] sm:$0xff] %v522
        %531 = vst [vmem:[#allocation10 + $0x30] sm:$0xff] %v523
        %532 = vst [vmem:[#allocation10 + $0x38] sm:$0xff] %v524
        // Predicated region
        $region57: #{tpu_custom_call.1} parent=35 // pred_check
          %p533 = pneg %p120
        $region58: #{tpu_custom_call.1} parent=35 // pred_check_branch
          %535 = sbr.rel (%p533) target = $region60
        $region59: #{tpu_custom_call.1} parent=35 // pred_region
          %537 = vsyncadd [#allocation6], 0
          %s538 = sshll.u32 [#allocation10], 4
          %s539 = int_to_ptr.vmem [resolvable:$true] %s538
          %s540 = sshll.u32 %s4, 4
          %s541 = int_to_ptr.hbm [resolvable:$true] %s540
          %546 = dma.vmem_to_hbm [thread:$0]  %s539, 1024, %s541, [#allocation6], 128, 128, 8
        $region60: #{tpu_custom_call.1} parent=35 // pred_fallthru
          _
        // Predicated region
        $region61: #{tpu_custom_call.1} parent=35 // pred_check
          %p547 = pneg %p120
        $region62: #{tpu_custom_call.1} parent=35 // pred_check_branch
          %549 = sbr.rel (%p547) target = $region64
        $region63: #{tpu_custom_call.1} parent=35 // pred_region
          %551 = dma.done [#allocation6], 1024
        $region64: #{tpu_custom_call.1} parent=35 // pred_fallthru
          _
      $region36: #{tpu_custom_call.1} parent=5 // pred_fallthru
        _
      %p552 = scmp.le.s32.totalorder 2, %s13
      // Predicated region
      $region65: #{tpu_custom_call.1} parent=5 // pred_check
        %p553 = pneg %p552
      $region66: #{tpu_custom_call.1} parent=5 // pred_check_branch
        %555 = sbr.rel (%p553) target = $region68
      $region67: #{tpu_custom_call.1} parent=5 // pred_region
        %s556 = ssub.s32 %s13, 2
      $region68: #{tpu_custom_call.1} parent=5 // pred_fallthru
        _
    $region6: #{tpu_custom_call.1} parent=1 // loop_footer
      %s17 = sadd.s32 1, %s13
    $region7: #{tpu_custom_call.1} parent=1 // loop_footer_branch
      %12 = sbr.rel target = $region3
    $region8: #{tpu_custom_call.1} parent=1 // loop_exit
      _
    %557 = vsyncpa [#allocation5], 1
    %s558 = scalar_lea.sflag [#allocation5], 1
    %559 = vsyncpa %s558, 1
    %560 = vsyncpa [#allocation8], 1
    %561 = vsyncpa [#allocation6], 1
    %s562 = scalar_lea.sflag [#allocation6], 1
    %563 = vsyncpa %s562, 1

</llo_original>
